<compile_context>
chip_gen: v6e
topology: v6e:2x2x1
jax: 0.10.0
libtpu: 0.0.40
codegen_flags: <defaults>
</compile_context>

<pallas_src>
import jax
import jax.numpy as jnp
from jax.experimental import pallas as pl
from jax.experimental.pallas import tpu as pltpu

LANE = 128            # TPU lane width
SUBLANE_BF16 = 16     # minimum sublane tile for bf16 blocks
MAX_BATCH_TILE = 1024  # ~0.3 MiB of per-tile traffic; far under any VMEM limit
SPLIT_THRESHOLD = 256  # below this, a single grid step (latency-bound regime)


def _round_up(x, m):
    return (x + m - 1) // m * m


def _choose_batch_tiling(B):
    """Pick (batch_tile, padded_batch).

    Small batches run as one grid step.  Larger batches get at least two grid
    steps (capped at MAX_BATCH_TILE rows each) so the "parallel" batch axis
    can shard across v7x's two TensorCores while still amortizing per-step
    pipeline overhead on v5e/v6e.
    """
    b_pad = _round_up(B, SUBLANE_BF16)
    if b_pad <= SPLIT_THRESHOLD:
        return b_pad, b_pad
    tb = min(MAX_BATCH_TILE, _round_up((b_pad + 1) // 2, SUBLANE_BF16))
    return tb, _round_up(b_pad, tb)


def vae_classifier_kernel(x_ref, we_ref, w_ref, b_ref, out_ref):
    """Fused VAE-encoder + classifier forward for one batch tile.

    x_ref  : [TB, D]        bf16 input features (natural feature width)
    we_ref : [D, 128]       bf16 VAE encoder weight (cols zero-padded to 128)
    w_ref  : [2*128, 128]   bf16 stacked, zero-padded weights:
             rows   0..127 -> W_mu @ W_fc1   (mu head folded into fc1)
             rows 128..255 -> W_fc2
    b_ref  : [8, 128]       f32 biases; row 0 = b_enc, row 1 = b_mu@W_fc1+b_fc1,
             row 2 = b_fc2 (padded class lanes filled with -1e30 so the
             softmax assigns them ~0 probability).  Must stay f32.
    out_ref: [TB, 128]      bf16 lane-dense softmax probabilities
    """
    b = b_ref[...]          # one vreg (8 x 128 x f32); slice rows in-register
    x = x_ref[...]

    # --- VAE encoder: relu(x @ W_enc + b_enc); contraction over natural K=D
    h = jnp.dot(x, we_ref[...], preferred_element_type=jnp.float32)
    h = jnp.maximum(h + b[0:1, :], 0.0)

    # --- folded (mu -> fc1): relu(h @ (W_mu@W_fc1) + (b_mu@W_fc1 + b_fc1))
    h = jnp.dot(h.astype(w_ref.dtype), w_ref[0:LANE, :],
                preferred_element_type=jnp.float32)
    h = jnp.maximum(h + b[1:2, :], 0.0)

    # --- fc2 logits (f32); padded class lanes carry -1e30 bias -> exp -> 0
    logits = jnp.dot(h.astype(w_ref.dtype), w_ref[LANE:2 * LANE, :],
                     preferred_element_type=jnp.float32) + b[2:3, :]

    # --- numerically stable softmax over the lane-dense class axis
    m = jnp.max(logits, axis=1, keepdims=True)
    e = jnp.exp(logits - m)
    denom = jnp.sum(e, axis=1, keepdims=True)
    # Exact reciprocal: negligible cost here and keeps probabilities calibrated
    # before the bf16 output cast.
    out_ref[...] = (e * pl.reciprocal(denom, approx=False)).astype(out_ref.dtype)


def pack_params(params):
    """Fold mu->fc1 and pack parameters into lane-padded operands.

    Returns:
      w_enc_p : [D, 128]      bf16
      w_slab  : [2*128, 128]  bf16  (folded mu@fc1, fc2)
      b_slab  : [8, 128]      f32
    """
    w_enc, b_enc = params["w_enc"], params["b_enc"]      # [D, H], [1, H]
    w_mu, b_mu = params["w_mu"], params["b_mu"]          # [H, L], [1, L]
    w_fc1, b_fc1 = params["w_fc1"], params["b_fc1"]      # [L, 10], [1, 10]
    w_fc2, b_fc2 = params["w_fc2"], params["b_fc2"]      # [10, C], [1, C]

    # Algebraic fold (valid because ReLU comes only after fc1):
    #   fc1(latent) = h @ (W_mu @ W_fc1) + (b_mu @ W_fc1 + b_fc1)
    w_mufc1 = w_mu @ w_fc1
    b_mufc1 = b_mu @ w_fc1 + b_fc1

    def pad_w(w, rows=LANE):
        r, c = w.shape
        return jnp.pad(w, ((0, rows - r), (0, LANE - c)))

    # Encoder weight keeps its natural K rows; only lanes are padded.
    w_enc_p = pad_w(w_enc, rows=w_enc.shape[0]).astype(jnp.bfloat16)   # [D, 128]

    w_slab = jnp.concatenate(
        [pad_w(w_mufc1), pad_w(w_fc2)], axis=0
    ).astype(jnp.bfloat16)                                             # [256, 128]

    def pad_b(bvec, fill=0.0):
        c = bvec.shape[1]
        return jnp.pad(bvec, ((0, 0), (0, LANE - c)), constant_values=fill)

    b_slab = jnp.concatenate(
        [pad_b(b_enc),
         pad_b(b_mufc1),
         pad_b(b_fc2, fill=-1e30),                        # kill padded classes
         jnp.zeros((5, LANE), jnp.float32)], axis=0)      # [8, 128] f32
    return w_enc_p, w_slab, b_slab


def vae_classifier_forward(x, w_enc_p, w_slab, b_slab, num_classes):
    """Lane-dense, batch-tiled forward. Returns [B, num_classes] bf16 probs."""
    B, D = x.shape
    assert w_enc_p.shape == (D, LANE), "encoder weight must match feature dim"

    tb, b_pad = _choose_batch_tiling(B)

    x_bf = x.astype(jnp.bfloat16)
    if b_pad != B:
        x_bf = jnp.pad(x_bf, ((0, b_pad - B), (0, 0)))

    out = pl.pallas_call(
        vae_classifier_kernel,
        out_shape=jax.ShapeDtypeStruct((b_pad, LANE), jnp.bfloat16),
        grid_spec=pltpu.PrefetchScalarGridSpec(
            num_scalar_prefetch=0,
            grid=(b_pad // tb,),
            in_specs=[
                pl.BlockSpec((tb, D), lambda i: (i, 0)),           # x tile
                # Constant index maps below -> fetched once, reused every step.
                pl.BlockSpec((D, LANE), lambda i: (0, 0)),         # W_enc
                pl.BlockSpec((2 * LANE, LANE), lambda i: (0, 0)),  # weight slab
                pl.BlockSpec((8, LANE), lambda i: (0, 0)),         # bias slab
            ],
            out_specs=pl.BlockSpec((tb, LANE), lambda i: (i, 0)),
        ),
        compiler_params=pltpu.CompilerParams(
            dimension_semantics=("parallel",)),
    )(x_bf, w_enc_p, w_slab, b_slab)

    return out[:B, :num_classes]


def init_params(key, input_dim, hidden_dim, latent_dim, num_classes):
    """Deterministic PyTorch-Linear-style init (uniform +/- 1/sqrt(fan_in))."""
    def linear(k, fan_in, fan_out):
        kw, kb = jax.random.split(k)
        bound = 1.0 / jnp.sqrt(jnp.float32(fan_in))
        w = jax.random.uniform(kw, (fan_in, fan_out), jnp.float32, -bound, bound)
        b = jax.random.uniform(kb, (1, fan_out), jnp.float32, -bound, bound)
        return w, b

    k_enc, k_mu, k_fc1, k_fc2 = jax.random.split(key, 4)
    w_enc, b_enc = linear(k_enc, input_dim, hidden_dim)   # VAE encoder fc
    w_mu, b_mu = linear(k_mu, hidden_dim, latent_dim)     # VAE mu head
    w_fc1, b_fc1 = linear(k_fc1, latent_dim, 10)          # classifier fc1
    w_fc2, b_fc2 = linear(k_fc2, 10, num_classes)         # classifier fc2
    return dict(w_enc=w_enc, b_enc=b_enc,
                w_mu=w_mu, b_mu=b_mu,
                w_fc1=w_fc1, b_fc1=b_fc1,
                w_fc2=w_fc2, b_fc2=b_fc2)


def reference_forward(x, params):
    """Pure-JAX f32 reference of the PyTorch module (eval-mode latent = mu)."""
    h = jnp.maximum(x @ params["w_enc"] + params["b_enc"], 0.0)
    latent = h @ params["w_mu"] + params["b_mu"]
    h1 = jnp.maximum(latent @ params["w_fc1"] + params["b_fc1"], 0.0)
    logits = h1 @ params["w_fc2"] + params["b_fc2"]
    return jax.nn.softmax(logits, axis=1)


if __name__ == "__main__":
    # Small shapes consistent with the module's forward (tabular cancer data).
    batch = 8
    input_dim = 32
    hidden_dim = 32
    latent_dim = 16
    num_classes = 2

    key = jax.random.PRNGKey(0)
    k_x, k_p = jax.random.split(key)
    x = jax.random.normal(k_x, (batch, input_dim), dtype=jnp.float32)
    params = init_params(k_p, input_dim, hidden_dim, latent_dim, num_classes)

    # Pack once (amortized across calls in an inference loop).
    w_enc_p, w_slab, b_slab = pack_params(params)

    probs = vae_classifier_forward(x, w_enc_p, w_slab, b_slab, num_classes)
    probs = jax.block_until_ready(probs)

    assert probs.shape == (batch, num_classes)
    assert probs.dtype == jnp.bfloat16

    probs_f32 = probs.astype(jnp.float32)
    # sanity: softmax rows sum to 1 (bf16 output quantization -> loose tol)
    row_sums = jnp.sum(probs_f32, axis=1)
    assert bool(jnp.all(jnp.abs(row_sums - 1.0) < 2e-2))

    # sanity: matches the pure-JAX f32 reference within bf16 tolerance
    ref = reference_forward(x, params)
    assert bool(jnp.all(jnp.abs(probs_f32 - ref) < 5e-2))

    print("KERNEL_OK")
</pallas_src>

<mosaic_0001>
module attributes {stable_mosaic.version = 11 : i64} {
  func.func @vae_classifier_kernel(%arg0: i32, %arg1: memref<16x32xbf16, #tpu.memory_space<vmem>>, %arg2: memref<32x128xbf16, #tpu.memory_space<vmem>>, %arg3: memref<256x128xbf16, #tpu.memory_space<vmem>>, %arg4: memref<8x128xf32, #tpu.memory_space<vmem>>, %arg5: memref<16x128xbf16, #tpu.memory_space<vmem>>) attributes {dimension_semantics = [#tpu.dimension_semantics<parallel>], iteration_bounds = array<i64: 1>, scalar_prefetch = 0 : i64, scratch_operands = 0 : i64, tpu.core_type = #tpu.core_type<tc>, window_params = [{transform_indices = @transform_0, window_bounds = array<i64: 16, 32>}, {pipeline_mode = #tpu.pipeline_mode<synchronous>, transform_indices = @transform_1, window_bounds = array<i64: 32, 128>}, {pipeline_mode = #tpu.pipeline_mode<synchronous>, transform_indices = @transform_2, window_bounds = array<i64: 256, 128>}, {pipeline_mode = #tpu.pipeline_mode<synchronous>, transform_indices = @transform_3, window_bounds = array<i64: 8, 128>}, {transform_indices = @transform_4, window_bounds = array<i64: 16, 128>}]} {
    %c0 = arith.constant 0 : index
    %c0_0 = arith.constant 0 : index
    %0 = vector.load %arg4[%c0, %c0_0] : memref<8x128xf32, #tpu.memory_space<vmem>>, vector<8x128xf32>
    %c0_1 = arith.constant 0 : index
    %c0_2 = arith.constant 0 : index
    %1 = vector.load %arg1[%c0_1, %c0_2] : memref<16x32xbf16, #tpu.memory_space<vmem>>, vector<16x32xbf16>
    %c0_3 = arith.constant 0 : index
    %c0_4 = arith.constant 0 : index
    %2 = vector.load %arg2[%c0_3, %c0_4] : memref<32x128xbf16, #tpu.memory_space<vmem>>, vector<32x128xbf16>
    %cst = arith.constant dense<0.000000e+00> : vector<16x128xf32>
    %3 = tpu.matmul %1, %2, %cst {dimension_numbers = #tpu.dot_dimension_numbers<[1], [0], [0], [1], [0, 0, 1, 1], [], []>} : vector<16x32xbf16>, vector<32x128xbf16>, vector<16x128xf32> -> vector<16x128xf32>
    %4 = vector.extract_strided_slice %0 {offsets = [0, 0], sizes = [1, 128], strides = [1, 1]} : vector<8x128xf32> to vector<1x128xf32>
    %5 = vector.broadcast %4 : vector<1x128xf32> to vector<16x128xf32>
    %6 = arith.addf %3, %5 : vector<16x128xf32>
    %cst_5 = arith.constant 0.000000e+00 : f32
    %7 = vector.broadcast %cst_5 : f32 to vector<16x128xf32>
    %8 = arith.maximumf %6, %7 : vector<16x128xf32>
    %9 = arith.truncf %8 : vector<16x128xf32> to vector<16x128xbf16>
    %c0_6 = arith.constant 0 : index
    %c0_7 = arith.constant 0 : index
    %10 = vector.load %arg3[%c0_6, %c0_7] : memref<256x128xbf16, #tpu.memory_space<vmem>>, vector<128x128xbf16>
    %cst_8 = arith.constant dense<0.000000e+00> : vector<16x128xf32>
    %11 = tpu.matmul %9, %10, %cst_8 {dimension_numbers = #tpu.dot_dimension_numbers<[1], [0], [0], [1], [0, 0, 1, 1], [], []>} : vector<16x128xbf16>, vector<128x128xbf16>, vector<16x128xf32> -> vector<16x128xf32>
    %12 = vector.extract_strided_slice %0 {offsets = [1, 0], sizes = [1, 128], strides = [1, 1]} : vector<8x128xf32> to vector<1x128xf32>
    %13 = vector.broadcast %12 : vector<1x128xf32> to vector<16x128xf32>
    %14 = arith.addf %11, %13 : vector<16x128xf32>
    %cst_9 = arith.constant 0.000000e+00 : f32
    %15 = vector.broadcast %cst_9 : f32 to vector<16x128xf32>
    %16 = arith.maximumf %14, %15 : vector<16x128xf32>
    %17 = arith.truncf %16 : vector<16x128xf32> to vector<16x128xbf16>
    %c128 = arith.constant 128 : index
    %c0_10 = arith.constant 0 : index
    %18 = vector.load %arg3[%c128, %c0_10] : memref<256x128xbf16, #tpu.memory_space<vmem>>, vector<128x128xbf16>
    %cst_11 = arith.constant dense<0.000000e+00> : vector<16x128xf32>
    %19 = tpu.matmul %17, %18, %cst_11 {dimension_numbers = #tpu.dot_dimension_numbers<[1], [0], [0], [1], [0, 0, 1, 1], [], []>} : vector<16x128xbf16>, vector<128x128xbf16>, vector<16x128xf32> -> vector<16x128xf32>
    %20 = vector.extract_strided_slice %0 {offsets = [2, 0], sizes = [1, 128], strides = [1, 1]} : vector<8x128xf32> to vector<1x128xf32>
    %21 = vector.broadcast %20 : vector<1x128xf32> to vector<16x128xf32>
    %22 = arith.addf %19, %21 : vector<16x128xf32>
    %cst_12 = arith.constant dense<0xFF800000> : vector<16xf32>
    %23 = vector.multi_reduction <maximumf>, %22, %cst_12 [1] : vector<16x128xf32> to vector<16xf32>
    %24 = vector.shape_cast %23 : vector<16xf32> to vector<16x1xf32>
    %25 = vector.broadcast %24 : vector<16x1xf32> to vector<16x128xf32>
    %26 = arith.subf %22, %25 : vector<16x128xf32>
    %27 = math.exp %26 : vector<16x128xf32>
    %cst_13 = arith.constant dense<0.000000e+00> : vector<16xf32>
    %28 = vector.multi_reduction <add>, %27, %cst_13 [1] : vector<16x128xf32> to vector<16xf32>
    %29 = vector.shape_cast %28 : vector<16xf32> to vector<16x1xf32>
    %30 = tpu.reciprocal %29 : vector<16x1xf32> -> vector<16x1xf32>
    %31 = vector.broadcast %30 : vector<16x1xf32> to vector<16x128xf32>
    %32 = arith.mulf %27, %31 : vector<16x128xf32>
    %33 = arith.truncf %32 : vector<16x128xf32> to vector<16x128xbf16>
    %c0_14 = arith.constant 0 : index
    %c0_15 = arith.constant 0 : index
    %34 = vector.load %arg5[%c0_14, %c0_15] : memref<16x128xbf16, #tpu.memory_space<vmem>>, vector<16x128xbf16>
    tpu.vector_store %arg5[%c0_14, %c0_15], %33 {strides = array<i32>} : memref<16x128xbf16, #tpu.memory_space<vmem>>, vector<16x128xbf16>,
    return
  }
  func.func @transform_0(%arg0: i32) -> (i32, i32) {
    %c0_i32 = arith.constant 0 : i32
    %c0_i32_0 = arith.constant 0 : i32
    return %arg0, %c0_i32 : i32, i32
  }
  func.func @transform_1(%arg0: i32) -> (i32, i32) {
    %c0_i32 = arith.constant 0 : i32
    %c0_i32_0 = arith.constant 0 : i32
    %c0_i32_1 = arith.constant 0 : i32
    return %c0_i32, %c0_i32_0 : i32, i32
  }
  func.func @transform_2(%arg0: i32) -> (i32, i32) {
    %c0_i32 = arith.constant 0 : i32
    %c0_i32_0 = arith.constant 0 : i32
    %c0_i32_1 = arith.constant 0 : i32
    return %c0_i32, %c0_i32_0 : i32, i32
  }
  func.func @transform_3(%arg0: i32) -> (i32, i32) {
    %c0_i32 = arith.constant 0 : i32
    %c0_i32_0 = arith.constant 0 : i32
    %c0_i32_1 = arith.constant 0 : i32
    return %c0_i32, %c0_i32_0 : i32, i32
  }
  func.func @transform_4(%arg0: i32) -> (i32, i32) {
    %c0_i32 = arith.constant 0 : i32
    %c0_i32_0 = arith.constant 0 : i32
    return %arg0, %c0_i32 : i32, i32
  }
}

</mosaic_0001>

<llo_original>
// kernel: tpu_custom_call.1
$region0: #{tpu_custom_call.1}
  #allocation0 [shape = 'u32[]', space=smem, size = 0x4, offset = 0x4, fixed_abs, tag = 'smem constant byte address 0x4 - core index']
  #allocation1 [shape = 'u32[144,128]{1,0:T(1,128)}', space=vmem, size = 0x12000, scoped, tag = 'internal scratch']
  %s0 = inlined_call_operand.hbm [shape: bf16[16,32], index: 0, kind: input, shape index: {}]
  %s1 = inlined_call_operand.hbm [shape: bf16[32,128], index: 1, kind: input, shape index: {}]
  %s2 = inlined_call_operand.hbm [shape: bf16[256,128], index: 2, kind: input, shape index: {}]
  %s3 = inlined_call_operand.hbm [shape: f32[8,128], index: 3, kind: input, shape index: {}]
  %s4 = inlined_call_operand.hbm [shape: bf16[16,128], index: 4, kind: output, shape index: {}]
  %s5 = sld [smem:[#allocation0]]
  $region42: #{tpu_custom_call.1} parent=0
    _
  %s7 = ssub.s32 1, %s5
  %s8 = scalar_select 0, %s7, %s5
  $region1: #{tpu_custom_call.1} parent=0
    #allocation2 [shape = 'u8[4096]{0}', space=vmem, size = 0x1000, scoped, tag = 'input window, operand 0, single buffered']
    #allocation3 [shape = 's32[1]{0}', space=sflag, size = 0x4, scoped, tag = 'scoped memory for tpu_custom_call.1']
    #allocation4 [shape = 's32[1]{0}', space=sflag, size = 0x4, scoped, tag = 'scoped memory for tpu_custom_call.1']
    #allocation5 [shape = 'u8[8192]{0}', space=vmem, size = 0x2000, scoped, tag = 'input window, operand 1, single buffered']
    #allocation6 [shape = 's32[1]{0}', space=sflag, size = 0x4, scoped, tag = 'scoped memory for tpu_custom_call.1']
    #allocation7 [shape = 'u8[65536]{0}', space=vmem, size = 0x10000, scoped, tag = 'input window, operand 2, single buffered']
    #allocation8 [shape = 'u8[4096]{0}', space=vmem, size = 0x1000, scoped, tag = 'input window, operand 3, single buffered']
    #allocation9 [shape = 's32[1]{0}', space=sflag, size = 0x4, scoped, tag = 'scoped memory for tpu_custom_call.1']
    #allocation10 [shape = 'u8[4096]{0}', space=vmem, size = 0x1000, scoped, tag = 'output window, operand 0, single buffered']
    %9 = vsyncpa [#allocation3], 0
    %10 = vsyncpa [#allocation6], 0
    %11 = vsyncpa [#allocation9], 0
    %12 = vsyncpa [#allocation4], 0
    // Predicated region
    $region2: #{tpu_custom_call.1} parent=1 // pred_check
      _
    $region3: #{tpu_custom_call.1} parent=1 // pred_check_branch
      %14 = sbr.rel (0) target = $region5
    $region4: #{tpu_custom_call.1} parent=1 // pred_region
      %s16 = ssub.s32 128, 128
      %17 = vsyncadd [#allocation3], %s16
      %s18 = sshll.u32 [#allocation2], 4
      %s19 = int_to_ptr.vmem [resolvable:$true] %s18
      %24 = dma.hbm_to_vmem [thread:$0]  %s0, 128, %s19, [#allocation3], 64, 64, 4
    $region5: #{tpu_custom_call.1} parent=1 // pred_fallthru
      _
    // Predicated region
    $region6: #{tpu_custom_call.1} parent=1 // pred_check
      _
    $region7: #{tpu_custom_call.1} parent=1 // pred_check_branch
      %26 = sbr.rel (0) target = $region9
    $region8: #{tpu_custom_call.1} parent=1 // pred_region
      %s28 = ssub.s32 256, 256
      %29 = vsyncadd [#allocation6], %s28
      %s30 = sshll.u32 [#allocation5], 4
      %s31 = int_to_ptr.vmem [resolvable:$true] %s30
      %36 = dma.hbm_to_vmem [thread:$0]  %s1, 256, %s31, [#allocation6], 64, 64, 4
    $region9: #{tpu_custom_call.1} parent=1 // pred_fallthru
      _
    // Predicated region
    $region10: #{tpu_custom_call.1} parent=1 // pred_check
      _
    $region11: #{tpu_custom_call.1} parent=1 // pred_check_branch
      %38 = sbr.rel (0) target = $region13
    $region12: #{tpu_custom_call.1} parent=1 // pred_region
      %s40 = ssub.s32 2048, 2048
      %41 = vsyncadd [#allocation6], %s40
      %s42 = sshll.u32 [#allocation7], 4
      %s43 = int_to_ptr.vmem [resolvable:$true] %s42
      %48 = dma.hbm_to_vmem [thread:$0]  %s2, 2048, %s43, [#allocation6], 64, 64, 4
    $region13: #{tpu_custom_call.1} parent=1 // pred_fallthru
      _
    // Predicated region
    $region14: #{tpu_custom_call.1} parent=1 // pred_check
      _
    $region15: #{tpu_custom_call.1} parent=1 // pred_check_branch
      %50 = sbr.rel (0) target = $region17
    $region16: #{tpu_custom_call.1} parent=1 // pred_region
      %s52 = ssub.s32 128, 128
      %53 = vsyncadd [#allocation9], %s52
      %s55 = sshll.u32 [#allocation8], 4
      %s56 = int_to_ptr.vmem [resolvable:$true] %s55
      %58 = dma.hbm_to_vmem [thread:$0]  %s3, 128, %s56, [#allocation9]
    $region17: #{tpu_custom_call.1} parent=1 // pred_fallthru
      _
    // Predicated region
    $region18: #{tpu_custom_call.1} parent=1 // pred_check
      _
    $region19: #{tpu_custom_call.1} parent=1 // pred_check_branch
      %60 = sbr.rel (0) target = $region21
    $region20: #{tpu_custom_call.1} parent=1 // pred_region
      %61 = dma.done [#allocation3], 128
    $region21: #{tpu_custom_call.1} parent=1 // pred_fallthru
      _
    // Predicated region
    $region22: #{tpu_custom_call.1} parent=1 // pred_check
      _
    $region23: #{tpu_custom_call.1} parent=1 // pred_check_branch
      %63 = sbr.rel (0) target = $region25
    $region24: #{tpu_custom_call.1} parent=1 // pred_region
      %64 = dma.done [#allocation6], 256
    $region25: #{tpu_custom_call.1} parent=1 // pred_fallthru
      _
    // Predicated region
    $region26: #{tpu_custom_call.1} parent=1 // pred_check
      _
    $region27: #{tpu_custom_call.1} parent=1 // pred_check_branch
      %66 = sbr.rel (0) target = $region29
    $region28: #{tpu_custom_call.1} parent=1 // pred_region
      %67 = dma.done [#allocation6], 2048
    $region29: #{tpu_custom_call.1} parent=1 // pred_fallthru
      _
    // Predicated region
    $region30: #{tpu_custom_call.1} parent=1 // pred_check
      _
    $region31: #{tpu_custom_call.1} parent=1 // pred_check_branch
      %69 = sbr.rel (0) target = $region33
    $region32: #{tpu_custom_call.1} parent=1 // pred_region
      %70 = dma.done [#allocation9], 128
    $region33: #{tpu_custom_call.1} parent=1 // pred_fallthru
      _
    %v72 = vld [vmem:[#allocation8] sm:$0xff]
    %v73 = vld [vmem:[#allocation2] sm:$0xf]
    %v74 = vld [vmem:[#allocation2 + $0x4] sm:$0xf]
    %v75 = vld [vmem:[#allocation5] sm:$0xf]
    %v76 = vld [vmem:[#allocation5 + $0x4] sm:$0xf]
    %v77 = vld [vmem:[#allocation5 + $0x8] sm:$0xf]
    %v78 = vld [vmem:[#allocation5 + $0xc] sm:$0xf]
    %v79 = vlaneseq
    %v80 = vshrl.u32 %v79, 7
    %v81 = vsub.s32 0, %v80
    %v82 = vrot.slane %v72, %v81
    %v85 = vunpack.c.l.b16 %v73
    %v86 = vunpack.c.l.b16 %v74
    %v87 = vpack.c.b16 %v86, %v85
    %v92 = vunpack.c.l.b16 %v75
    %v93 = vunpack.c.l.b16 %v76
    %v94 = vunpack.c.l.b16 %v77
    %v95 = vunpack.c.l.b16 %v78
    %v96 = vpack.c.b16 %v93, %v92
    %v97 = vpack.c.b16 %v95, %v94
    %vm100 = vcmask 261120
    %v102 = vsel %vm100, %v87, 0
    %104 = vmatprep.subr.bf16.mxu0 0
    %105 = vmatpush1.bf16.msra.mxu0 0
    %106 = vmatprep.subr.bf16.mxu0 0
    %107 = vmatpush1.bf16.msra.mxu0 0
    %108 = vmatprep.subr.bf16.mxu0 0
    %109 = vmatpush1.bf16.msra.mxu0 0
    %110 = vmatprep.subr.bf16.mxu0 0
    %111 = vmatpush1.bf16.msra.mxu0 0
    %112 = vmatprep.subr.bf16.mxu0 0
    %113 = vmatpush1.bf16.msra.mxu0 0
    %114 = vmatprep.subr.bf16.mxu0 0
    %115 = vmatpush1.bf16.msra.mxu0 0
    %116 = vmatprep.subr.bf16.mxu0 0
    %117 = vmatpush1.bf16.msra.mxu0 %v97
    %118 = vmatprep.subr.bf16.mxu0 0
    %119 = vmatpush1.bf16.msra.mxu0 %v96
    %120 = vmatprep.subr.bf16.mxu0 0
    %121 = vmatpush2.bf16.msra.mxu0 0
    %122 = vmatprep.subr.bf16.mxu0 0
    %123 = vmatpush2.bf16.msra.mxu0 0
    %124 = vmatprep.subr.bf16.mxu0 0
    %125 = vmatpush2.bf16.msra.mxu0 0
    %126 = vmatprep.subr.bf16.mxu0 0
    %127 = vmatpush2.bf16.msra.mxu0 0
    %128 = vmatprep.subr.bf16.mxu0 0
    %129 = vmatpush2.bf16.msra.mxu0 0
    %130 = vmatprep.subr.bf16.mxu0 0
    %131 = vmatpush2.bf16.msra.mxu0 0
    %132 = vmatprep.subr.bf16.mxu0 0
    %133 = vmatpush2.bf16.msra.mxu0 0
    %134 = vmatprep.subr.bf16.mxu0 0
    %135 = vmatpush2.bf16.msra.mxu0 0
    %136 = vmatprep.mubr.bf16.mxu0 0
    %137 = vmatmul.mubr.bf16.gmra.mxu0 %v102
    %v138 = vpop.f32.mrf.mxu0
    %v139 = vadd.f32 %v82, %v138
    %v140 = vpop.f32.mrf.mxu0
    %v141 = vpop.f32.mrf.mxu0
    %v142 = vadd.f32 %v82, %v141
    %v143 = vpop.f32.mrf.mxu0
    %144 = vdwg.mxu0
    %v145 = vmax.f32 %v139, 0.0
    %v146 = vmax.f32 %v142, 0.0
    %v147 = vpack.c.bf16 %v146, %v145
    %v148 = vld [vmem:[#allocation7] sm:$0xf]
    %v149 = vld [vmem:[#allocation7 + $0x4] sm:$0xf]
    %v150 = vld [vmem:[#allocation7 + $0x8] sm:$0xf]
    %v151 = vld [vmem:[#allocation7 + $0xc] sm:$0xf]
    %v152 = vld [vmem:[#allocation7 + $0x10] sm:$0xf]
    %v153 = vld [vmem:[#allocation7 + $0x14] sm:$0xf]
    %v154 = vld [vmem:[#allocation7 + $0x18] sm:$0xf]
    %v155 = vld [vmem:[#allocation7 + $0x1c] sm:$0xf]
    %v156 = vld [vmem:[#allocation7 + $0x20] sm:$0xf]
    %v157 = vld [vmem:[#allocation7 + $0x24] sm:$0xf]
    %v158 = vld [vmem:[#allocation7 + $0x28] sm:$0xf]
    %v159 = vld [vmem:[#allocation7 + $0x2c] sm:$0xf]
    %v160 = vld [vmem:[#allocation7 + $0x30] sm:$0xf]
    %v161 = vld [vmem:[#allocation7 + $0x34] sm:$0xf]
    %v162 = vld [vmem:[#allocation7 + $0x38] sm:$0xf]
    %v163 = vld [vmem:[#allocation7 + $0x3c] sm:$0xf]
    %v164 = vlaneseq
    %v165 = vshrl.u32 %v164, 7
    %v166 = vsub.s32 1, %v165
    %v167 = vrot.slane %v72, %v166
    %v184 = vunpack.c.l.b16 %v148
    %v185 = vunpack.c.l.b16 %v149
    %v186 = vunpack.c.l.b16 %v150
    %v187 = vunpack.c.l.b16 %v151
    %v188 = vunpack.c.l.b16 %v152
    %v189 = vunpack.c.l.b16 %v153
    %v190 = vunpack.c.l.b16 %v154
    %v191 = vunpack.c.l.b16 %v155
    %v192 = vunpack.c.l.b16 %v156
    %v193 = vunpack.c.l.b16 %v157
    %v194 = vunpack.c.l.b16 %v158
    %v195 = vunpack.c.l.b16 %v159
    %v196 = vunpack.c.l.b16 %v160
    %v197 = vunpack.c.l.b16 %v161
    %v198 = vunpack.c.l.b16 %v162
    %v199 = vunpack.c.l.b16 %v163
    %v200 = vpack.c.b16 %v185, %v184
    %v201 = vpack.c.b16 %v187, %v186
    %v202 = vpack.c.b16 %v189, %v188
    %v203 = vpack.c.b16 %v191, %v190
    %v204 = vpack.c.b16 %v193, %v192
    %v205 = vpack.c.b16 %v195, %v194
    %v206 = vpack.c.b16 %v197, %v196
    %v207 = vpack.c.b16 %v199, %v198
    %216 = vmatprep.subr.bf16.mxu0 0
    %217 = vmatpush1.bf16.msra.mxu0 %v207
    %218 = vmatprep.subr.bf16.mxu0 0
    %219 = vmatpush1.bf16.msra.mxu0 %v206
    %220 = vmatprep.subr.bf16.mxu0 0
    %221 = vmatpush1.bf16.msra.mxu0 %v205
    %222 = vmatprep.subr.bf16.mxu0 0
    %223 = vmatpush1.bf16.msra.mxu0 %v204
    %224 = vmatprep.subr.bf16.mxu0 0
    %225 = vmatpush1.bf16.msra.mxu0 %v203
    %226 = vmatprep.subr.bf16.mxu0 0
    %227 = vmatpush1.bf16.msra.mxu0 %v202
    %228 = vmatprep.subr.bf16.mxu0 0
    %229 = vmatpush1.bf16.msra.mxu0 %v201
    %230 = vmatprep.subr.bf16.mxu0 0
    %231 = vmatpush1.bf16.msra.mxu0 %v200
    %232 = vmatprep.subr.bf16.mxu0 0
    %233 = vmatpush2.bf16.msra.mxu0 0
    %234 = vmatprep.subr.bf16.mxu0 0
    %235 = vmatpush2.bf16.msra.mxu0 0
    %236 = vmatprep.subr.bf16.mxu0 0
    %237 = vmatpush2.bf16.msra.mxu0 0
    %238 = vmatprep.subr.bf16.mxu0 0
    %239 = vmatpush2.bf16.msra.mxu0 0
    %240 = vmatprep.subr.bf16.mxu0 0
    %241 = vmatpush2.bf16.msra.mxu0 0
    %242 = vmatprep.subr.bf16.mxu0 0
    %243 = vmatpush2.bf16.msra.mxu0 0
    %244 = vmatprep.subr.bf16.mxu0 0
    %245 = vmatpush2.bf16.msra.mxu0 0
    %246 = vmatprep.subr.bf16.mxu0 0
    %247 = vmatpush2.bf16.msra.mxu0 0
    %248 = vmatprep.mubr.bf16.mxu0 0
    %249 = vmatmul.mubr.bf16.gmra.mxu0 %v147
    %v250 = vpop.f32.mrf.mxu0
    %v251 = vadd.f32 %v167, %v250
    %v252 = vpop.f32.mrf.mxu0
    %v253 = vpop.f32.mrf.mxu0
    %v254 = vadd.f32 %v167, %v253
    %v255 = vpop.f32.mrf.mxu0
    %256 = vdwg.mxu0
    %v257 = vmax.f32 %v251, 0.0
    %v258 = vmax.f32 %v254, 0.0
    %v259 = vpack.c.bf16 %v258, %v257
    %v260 = vld [vmem:[#allocation7 + $0x40] sm:$0xf]
    %v261 = vld [vmem:[#allocation7 + $0x44] sm:$0xf]
    %v262 = vld [vmem:[#allocation7 + $0x48] sm:$0xf]
    %v263 = vld [vmem:[#allocation7 + $0x4c] sm:$0xf]
    %v264 = vld [vmem:[#allocation7 + $0x50] sm:$0xf]
    %v265 = vld [vmem:[#allocation7 + $0x54] sm:$0xf]
    %v266 = vld [vmem:[#allocation7 + $0x58] sm:$0xf]
    %v267 = vld [vmem:[#allocation7 + $0x5c] sm:$0xf]
    %v268 = vld [vmem:[#allocation7 + $0x60] sm:$0xf]
    %v269 = vld [vmem:[#allocation7 + $0x64] sm:$0xf]
    %v270 = vld [vmem:[#allocation7 + $0x68] sm:$0xf]
    %v271 = vld [vmem:[#allocation7 + $0x6c] sm:$0xf]
    %v272 = vld [vmem:[#allocation7 + $0x70] sm:$0xf]
    %v273 = vld [vmem:[#allocation7 + $0x74] sm:$0xf]
    %v274 = vld [vmem:[#allocation7 + $0x78] sm:$0xf]
    %v275 = vld [vmem:[#allocation7 + $0x7c] sm:$0xf]
    %v276 = vlaneseq
    %v277 = vshrl.u32 %v276, 7
    %v278 = vsub.s32 2, %v277
    %v279 = vrot.slane %v72, %v278
    %v296 = vunpack.c.l.b16 %v260
    %v297 = vunpack.c.l.b16 %v261
    %v298 = vunpack.c.l.b16 %v262
    %v299 = vunpack.c.l.b16 %v263
    %v300 = vunpack.c.l.b16 %v264
    %v301 = vunpack.c.l.b16 %v265
    %v302 = vunpack.c.l.b16 %v266
    %v303 = vunpack.c.l.b16 %v267
    %v304 = vunpack.c.l.b16 %v268
    %v305 = vunpack.c.l.b16 %v269
    %v306 = vunpack.c.l.b16 %v270
    %v307 = vunpack.c.l.b16 %v271
    %v308 = vunpack.c.l.b16 %v272
    %v309 = vunpack.c.l.b16 %v273
    %v310 = vunpack.c.l.b16 %v274
    %v311 = vunpack.c.l.b16 %v275
    %v312 = vpack.c.b16 %v297, %v296
    %v313 = vpack.c.b16 %v299, %v298
    %v314 = vpack.c.b16 %v301, %v300
    %v315 = vpack.c.b16 %v303, %v302
    %v316 = vpack.c.b16 %v305, %v304
    %v317 = vpack.c.b16 %v307, %v306
    %v318 = vpack.c.b16 %v309, %v308
    %v319 = vpack.c.b16 %v311, %v310
    %328 = vmatprep.subr.bf16.mxu0 0
    %329 = vmatpush1.bf16.msra.mxu0 %v319
    %330 = vmatprep.subr.bf16.mxu0 0
    %331 = vmatpush1.bf16.msra.mxu0 %v318
    %332 = vmatprep.subr.bf16.mxu0 0
    %333 = vmatpush1.bf16.msra.mxu0 %v317
    %334 = vmatprep.subr.bf16.mxu0 0
    %335 = vmatpush1.bf16.msra.mxu0 %v316
    %336 = vmatprep.subr.bf16.mxu0 0
    %337 = vmatpush1.bf16.msra.mxu0 %v315
    %338 = vmatprep.subr.bf16.mxu0 0
    %339 = vmatpush1.bf16.msra.mxu0 %v314
    %340 = vmatprep.subr.bf16.mxu0 0
    %341 = vmatpush1.bf16.msra.mxu0 %v313
    %342 = vmatprep.subr.bf16.mxu0 0
    %343 = vmatpush1.bf16.msra.mxu0 %v312
    %344 = vmatprep.subr.bf16.mxu0 0
    %345 = vmatpush2.bf16.msra.mxu0 0
    %346 = vmatprep.subr.bf16.mxu0 0
    %347 = vmatpush2.bf16.msra.mxu0 0
    %348 = vmatprep.subr.bf16.mxu0 0
    %349 = vmatpush2.bf16.msra.mxu0 0
    %350 = vmatprep.subr.bf16.mxu0 0
    %351 = vmatpush2.bf16.msra.mxu0 0
    %352 = vmatprep.subr.bf16.mxu0 0
    %353 = vmatpush2.bf16.msra.mxu0 0
    %354 = vmatprep.subr.bf16.mxu0 0
    %355 = vmatpush2.bf16.msra.mxu0 0
    %356 = vmatprep.subr.bf16.mxu0 0
    %357 = vmatpush2.bf16.msra.mxu0 0
    %358 = vmatprep.subr.bf16.mxu0 0
    %359 = vmatpush2.bf16.msra.mxu0 0
    %360 = vmatprep.mubr.bf16.mxu0 0
    %361 = vmatmul.mubr.bf16.gmra.mxu0 %v259
    %v362 = vpop.f32.mrf.mxu0
    %v363 = vadd.f32 %v279, %v362
    %v364 = vpop.f32.mrf.mxu0
    %v365 = vpop.f32.mrf.mxu0
    %v366 = vadd.f32 %v279, %v365
    %v367 = vpop.f32.mrf.mxu0
    %368 = vdwg.mxu0
    %369 = vmax.xlane.f32.xlu0 %v363
    %v370 = vpop.xlane.xlu0 %369
    %371 = vmax.xlane.f32.xlu0 %v366
    %v372 = vpop.xlane.xlu0 %371
    %v373 = vsub.f32 %v363, %v370
    %v374 = vsub.f32 %v366, %v372
    %v375 = vmul.f32 %v373, 1.442695
    %v376 = vpow.pop %v375
    %v377 = vmul.f32 %v374, 1.442695
    %v378 = vpow.pop %v377
    %379 = vadd.xlane.f32.xlu0 %v376
    %v380 = vpop.xlane.xlu0 %379
    %381 = vadd.xlane.f32.xlu0 %v378
    %v382 = vpop.xlane.xlu0 %381
    %v383 = vrcp.pop %v380
    %v384 = vrcp.pop %v382
    %v385 = vmul.f32 %v376, %v383
    %v386 = vmul.f32 %v378, %v384
    %v387 = vpack.c.bf16 %v386, %v385
    %v389 = vunpack.c.l.b16 %v387
    %v390 = vunpack.c.h.b16 %v387
    %v391 = vpack.c.b16 %v389, %v389
    %v392 = vpack.c.b16 %v390, %v390
    %395 = vst [vmem:[#allocation10] sm:$0xf] %v391
    %396 = vst [vmem:[#allocation10 + $0x4] sm:$0xf] %v392
    // Predicated region
    $region34: #{tpu_custom_call.1} parent=1 // pred_check
      _
    $region35: #{tpu_custom_call.1} parent=1 // pred_check_branch
      %398 = sbr.rel (0) target = $region37
    $region36: #{tpu_custom_call.1} parent=1 // pred_region
      %s400 = ssub.s32 128, 128
      %401 = vsyncadd [#allocation4], %s400
      %s402 = sshll.u32 [#allocation10], 4
      %s403 = int_to_ptr.vmem [resolvable:$true] %s402
      %408 = dma.vmem_to_hbm [thread:$0]  %s403, 128, %s4, [#allocation4], 64, 64, 4
    $region37: #{tpu_custom_call.1} parent=1 // pred_fallthru
      _
    // Predicated region
    $region38: #{tpu_custom_call.1} parent=1 // pred_check
      _
    $region39: #{tpu_custom_call.1} parent=1 // pred_check_branch
      %410 = sbr.rel (0) target = $region41
    $region40: #{tpu_custom_call.1} parent=1 // pred_region
      %411 = dma.done [#allocation4], 128
    $region41: #{tpu_custom_call.1} parent=1 // pred_fallthru
      _
    %412 = vsyncpa [#allocation3], 1
    %413 = vsyncpa [#allocation6], 1
    %414 = vsyncpa [#allocation9], 1
    %415 = vsyncpa [#allocation4], 1

</llo_original>
